<compile_context>
chip_gen: v5e
topology: v5e:2x2
jax: 0.10.0
libtpu: 0.0.40
codegen_flags: <defaults>
</compile_context>

<pallas_src>
import functools

import numpy as np
import jax
import jax.numpy as jnp
from jax.experimental import pallas as pl
from jax.experimental.pallas import tpu as pltpu


def _round_up(n, m):
    return ((n + m - 1) // m) * m


# --------------------------------------------------------------------------------------
# Kernel: full CNN forward for a (TB, W0) tile of samples per grid step.
# All convs+pools are pre-folded into banded matrices, so the body is 5 matmuls + VPU.
# --------------------------------------------------------------------------------------
def _cnn_kernel(x_ref, w1_ref, b1_ref, w2_ref, b2_ref, w3_ref, b3_ref,
                wfc1_ref, bfc1_ref, wfc2_ref, bfc2_ref, o_ref):
    f32 = jnp.float32

    def leaky_relu(v):                        # PyTorch default negative_slope = 0.01
        return jnp.where(v > 0, v, f32(0.01) * v)

    x = x_ref[...].astype(f32)                                                   # (TB, W0)
    # conv1 + BN + LeakyReLU + stride-2 pool  (one banded matmul)
    h = leaky_relu(jnp.dot(x, w1_ref[...], preferred_element_type=f32) + b1_ref[...])
    # conv2 + BN + LeakyReLU + pool
    h = leaky_relu(jnp.dot(h, w2_ref[...], preferred_element_type=f32) + b2_ref[...])
    # conv3 + BN + LeakyReLU + pool
    h = leaky_relu(jnp.dot(h, w3_ref[...], preferred_element_type=f32) + b3_ref[...])
    # fc1 (+ Dropout == identity at inference); hidden padded to 128 lanes with zeros
    h = jnp.dot(h, wfc1_ref[...], preferred_element_type=f32) + bfc1_ref[...]
    # fc2; class dim padded to a multiple of 128 for lane-dense stores
    o_ref[...] = (jnp.dot(h, wfc2_ref[...], preferred_element_type=f32)
                  + bfc2_ref[...]).astype(o_ref.dtype)


# --------------------------------------------------------------------------------------
# Host wrapper: single fused pallas_call, batch-blocked grid.
# --------------------------------------------------------------------------------------
def cnn_forward(x, params, *, num_classes, block_batch=128):
    """x: (B, 1, W) float32 -- the (H == 1) 1-D-signal configuration of this CNN."""
    B, H, W0 = x.shape
    assert H == 1, "kernel implements the (H == 1) 1-D-signal configuration of this CNN"
    x2 = x.reshape(B, W0).astype(jnp.float32)

    TB = min(block_batch, _round_up(B, 8))     # samples per grid step (sublane dim)
    Bp = _round_up(B, TB)
    if Bp != B:
        x2 = jnp.pad(x2, ((0, Bp - B), (0, 0)))

    Cp = params["wfc2"].shape[1]               # class dim padded to multiple of 128

    def const_spec(shape):                     # full-array block, DMA'd once, VMEM-resident
        return pl.BlockSpec(shape, lambda i: (0, 0))

    out = pl.pallas_call(
        _cnn_kernel,
        out_shape=jax.ShapeDtypeStruct((Bp, Cp), jnp.float32),
        grid_spec=pltpu.PrefetchScalarGridSpec(
            num_scalar_prefetch=0,
            grid=(Bp // TB,),
            in_specs=[
                pl.BlockSpec((TB, W0), lambda i: (i, 0)),      # x tile (samples on sublanes)
                const_spec(params["w1"].shape), const_spec(params["b1"].shape),
                const_spec(params["w2"].shape), const_spec(params["b2"].shape),
                const_spec(params["w3"].shape), const_spec(params["b3"].shape),
                const_spec(params["wfc1"].shape), const_spec(params["bfc1"].shape),
                const_spec(params["wfc2"].shape), const_spec(params["bfc2"].shape),
            ],
            out_specs=pl.BlockSpec((TB, Cp), lambda i: (i, 0)),
        ),
        compiler_params=pltpu.CompilerParams(
            dimension_semantics=("parallel",),
        ),
    )(x2, params["w1"], params["b1"], params["w2"], params["b2"],
      params["w3"], params["b3"], params["wfc1"], params["bfc1"],
      params["wfc2"], params["bfc2"])
    return out[:B, :num_classes]


# --------------------------------------------------------------------------------------
# Parameters: torch-layout init, then fold BN + pool into banded matrices (done once).
# --------------------------------------------------------------------------------------
def init_torch_params(key, input_shape, num_classes):
    """Deterministic random parameters in PyTorch layout, incl. BN running stats."""
    _, w_in = input_shape
    w_final = (((w_in - 4) // 2 - 1) // 2 - 1) // 2
    dim1 = w_final * 32
    keys = iter(jax.random.split(key, 24))

    def uni(shape, fan_in):
        bound = 1.0 / float(fan_in) ** 0.5
        return jax.random.uniform(next(keys), shape, jnp.float32, -bound, bound)

    def bn(c):
        return {
            "gamma": 1.0 + 0.1 * jax.random.normal(next(keys), (c,), jnp.float32),
            "beta": 0.1 * jax.random.normal(next(keys), (c,), jnp.float32),
            "mean": 0.1 * jax.random.normal(next(keys), (c,), jnp.float32),
            "var": jnp.abs(1.0 + 0.1 * jax.random.normal(next(keys), (c,), jnp.float32)),
        }

    return {
        "conv1_w": uni((32, 1, 1, 5), 1 * 5), "conv1_b": uni((32,), 1 * 5), "bn1": bn(32),
        "conv2_w": uni((32, 32, 1, 3), 32 * 3), "conv2_b": uni((32,), 32 * 3), "bn2": bn(32),
        "conv3_w": uni((32, 32, 1, 3), 32 * 3), "conv3_b": uni((32,), 32 * 3), "bn3": bn(32),
        "fc1_w": uni((100, dim1), dim1), "fc1_b": uni((100,), dim1),
        "fc2_w": uni((num_classes, 100), 100), "fc2_b": uni((num_classes,), 100),
    }


def pack_params(tp, input_shape, num_classes, eps=1e-5):
    """Fold eval-mode BN into convs, then fold conv taps + stride-2 pooling into banded
    block matrices so every layer is a single lane-dense matmul in the kernel."""
    w_in = input_shape[1]
    W0 = w_in
    W1 = ((W0 - 4) - 1) // 2 + 1          # positions after conv1 + MaxPool(1,2)
    W2 = ((W1 - 2) - 1) // 2 + 1
    W3 = ((W2 - 2) - 1) // 2 + 1
    assert W3 * 32 == (((w_in - 4) // 2 - 1) // 2 - 1) // 2 * 32, "shape formula mismatch"

    def fold(conv_w, conv_b, bn):
        scale = bn["gamma"] / jnp.sqrt(bn["var"] + eps)                  # (Cout,)
        return conv_w * scale[:, None, None, None], (conv_b - bn["mean"]) * scale + bn["beta"]

    w1, b1 = fold(tp["conv1_w"], tp["conv1_b"], tp["bn1"])
    w2, b2 = fold(tp["conv2_w"], tp["conv2_b"], tp["bn2"])
    w3, b3 = fold(tp["conv3_w"], tp["conv3_b"], tp["bn3"])

    # taps in [tap, cin, cout] layout
    t1 = np.transpose(np.asarray(w1[:, :, 0, :]), (2, 1, 0))             # (5, 1, 32)
    t2 = np.transpose(np.asarray(w2[:, :, 0, :]), (2, 1, 0))             # (3, 32, 32)
    t3 = np.transpose(np.asarray(w3[:, :, 0, :]), (2, 1, 0))             # (3, 32, 32)

    def band(taps, n_in_pos, n_out_pos):
        """Banded matrix (n_in_pos*cin, n_out_pos*cout): output position w reads input
        positions 2w+j (conv tap j) -> conv + stride-2 pool in one matmul."""
        k, cin, cout = taps.shape
        m = np.zeros((n_in_pos * cin, n_out_pos * cout), np.float32)
        for w in range(n_out_pos):
            for j in range(k):
                r = (2 * w + j) * cin
                m[r:r + cin, w * cout:(w + 1) * cout] = taps[j]
        return jnp.asarray(m)

    w1b = band(t1, W0, W1)                                               # (W0,     W1*32)
    w2b = band(t2, W1, W2)                                               # (W1*32,  W2*32)
    w3b = band(t3, W2, W3)                                               # (W2*32,  W3*32)
    b1b = jnp.tile(b1, W1).reshape(1, W1 * 32)
    b2b = jnp.tile(b2, W2).reshape(1, W2 * 32)
    b3b = jnp.tile(b3, W3).reshape(1, W3 * 32)

    # torch flatten is channel-major (flat = c*W3 + w); kernel features are w-major (w*32+c).
    kfc1 = jnp.transpose(tp["fc1_w"].reshape(100, 32, W3), (2, 1, 0)).reshape(W3 * 32, 100)
    Hp = 128                                                             # pad fc hidden 100->128
    Cp = _round_up(max(num_classes, 1), 128)                             # pad classes to 128k
    kfc1 = jnp.pad(kfc1, ((0, 0), (0, Hp - 100)))
    bfc1 = jnp.pad(tp["fc1_b"], (0, Hp - 100)).reshape(1, Hp)
    kfc2 = jnp.pad(jnp.transpose(tp["fc2_w"], (1, 0)),
                   ((0, Hp - 100), (0, Cp - num_classes)))
    bfc2 = jnp.pad(tp["fc2_b"], (0, Cp - num_classes)).reshape(1, Cp)

    return {"w1": w1b, "b1": b1b, "w2": w2b, "b2": b2b, "w3": w3b, "b3": b3b,
            "wfc1": kfc1, "bfc1": bfc1, "wfc2": kfc2, "bfc2": bfc2}


# --------------------------------------------------------------------------------------
# Pure-JAX reference of the torch module (eval mode) for a correctness check.
# --------------------------------------------------------------------------------------
def cnn_reference(x, tp, eps=1e-5):
    def conv_block(h, w, bias, bn, k):
        # h: (B, Cin, W);  w: (Cout, Cin, 1, k)
        w_out = h.shape[-1] - k + 1
        out = jnp.zeros((h.shape[0], w.shape[0], w_out), jnp.float32)
        for j in range(k):
            out = out + jnp.einsum("bcw,oc->bow", h[:, :, j:j + w_out], w[:, :, 0, j])
        out = out + bias[None, :, None]
        scale = bn["gamma"] / jnp.sqrt(bn["var"] + eps)
        out = (out - bn["mean"][None, :, None]) * scale[None, :, None] + bn["beta"][None, :, None]
        out = jnp.where(out > 0, out, 0.01 * out)                        # LeakyReLU(0.01)
        return out[:, :, ::2]                                            # MaxPool2d(1, stride=2)

    h = x                                                                # (B, 1, W): H==1 -> Cin=1
    h = conv_block(h, tp["conv1_w"], tp["conv1_b"], tp["bn1"], 5)
    h = conv_block(h, tp["conv2_w"], tp["conv2_b"], tp["bn2"], 3)
    h = conv_block(h, tp["conv3_w"], tp["conv3_b"], tp["bn3"], 3)
    flat = h.reshape(h.shape[0], -1)                                     # channel-major, like .view
    fc1 = flat @ tp["fc1_w"].T + tp["fc1_b"]                             # Dropout == identity (eval)
    return fc1 @ tp["fc2_w"].T + tp["fc2_b"]


if __name__ == "__main__":
    # Small, self-consistent shapes: 1-D signal of length 44, batch 2, 5 classes.
    input_shape = (1, 44)        # (H, W) as the torch ctor expects; dim1 = 4*32 = 128
    num_classes = 5
    batch = 2

    key = jax.random.PRNGKey(0)
    kx, kp = jax.random.split(key)
    x = jax.random.normal(kx, (batch, input_shape[0], input_shape[1]), jnp.float32)

    torch_params = init_torch_params(kp, input_shape, num_classes)
    params = pack_params(torch_params, input_shape, num_classes)

    fwd = jax.jit(functools.partial(cnn_forward, num_classes=num_classes))
    out = jax.block_until_ready(fwd(x, params))

    ref = jax.block_until_ready(cnn_reference(x, torch_params))
    assert out.shape == (batch, num_classes)
    assert bool(jnp.all(jnp.isfinite(out)))
    assert bool(jnp.allclose(out, ref, atol=1e-3, rtol=1e-3)), "kernel/reference mismatch"
    print("KERNEL_OK")
</pallas_src>

<mosaic_0001>
module attributes {stable_mosaic.version = 11 : i64} {
  func.func @_cnn_kernel(%arg0: i32, %arg1: memref<8x44xf32, #tpu.memory_space<vmem>>, %arg2: memref<44x640xf32, #tpu.memory_space<vmem>>, %arg3: memref<1x640xf32, #tpu.memory_space<vmem>>, %arg4: memref<640x288xf32, #tpu.memory_space<vmem>>, %arg5: memref<1x288xf32, #tpu.memory_space<vmem>>, %arg6: memref<288x128xf32, #tpu.memory_space<vmem>>, %arg7: memref<1x128xf32, #tpu.memory_space<vmem>>, %arg8: memref<128x128xf32, #tpu.memory_space<vmem>>, %arg9: memref<1x128xf32, #tpu.memory_space<vmem>>, %arg10: memref<128x128xf32, #tpu.memory_space<vmem>>, %arg11: memref<1x128xf32, #tpu.memory_space<vmem>>, %arg12: memref<8x128xf32, #tpu.memory_space<vmem>>) attributes {dimension_semantics = [#tpu.dimension_semantics<parallel>], iteration_bounds = array<i64: 1>, scalar_prefetch = 0 : i64, scratch_operands = 0 : i64, tpu.core_type = #tpu.core_type<tc>, window_params = [{transform_indices = @transform_0, window_bounds = array<i64: 8, 44>}, {pipeline_mode = #tpu.pipeline_mode<synchronous>, transform_indices = @transform_1, window_bounds = array<i64: 44, 640>}, {pipeline_mode = #tpu.pipeline_mode<synchronous>, transform_indices = @transform_2, window_bounds = array<i64: 1, 640>}, {pipeline_mode = #tpu.pipeline_mode<synchronous>, transform_indices = @transform_3, window_bounds = array<i64: 640, 288>}, {pipeline_mode = #tpu.pipeline_mode<synchronous>, transform_indices = @transform_4, window_bounds = array<i64: 1, 288>}, {pipeline_mode = #tpu.pipeline_mode<synchronous>, transform_indices = @transform_5, window_bounds = array<i64: 288, 128>}, {pipeline_mode = #tpu.pipeline_mode<synchronous>, transform_indices = @transform_6, window_bounds = array<i64: 1, 128>}, {pipeline_mode = #tpu.pipeline_mode<synchronous>, transform_indices = @transform_7, window_bounds = array<i64: 128, 128>}, {pipeline_mode = #tpu.pipeline_mode<synchronous>, transform_indices = @transform_8, window_bounds = array<i64: 1, 128>}, {pipeline_mode = #tpu.pipeline_mode<synchronous>, transform_indices = @transform_9, window_bounds = array<i64: 128, 128>}, {pipeline_mode = #tpu.pipeline_mode<synchronous>, transform_indices = @transform_10, window_bounds = array<i64: 1, 128>}, {transform_indices = @transform_11, window_bounds = array<i64: 8, 128>}]} {
    %c0 = arith.constant 0 : index
    %c0_0 = arith.constant 0 : index
    %0 = vector.load %arg1[%c0, %c0_0] : memref<8x44xf32, #tpu.memory_space<vmem>>, vector<8x44xf32>
    %c0_1 = arith.constant 0 : index
    %c0_2 = arith.constant 0 : index
    %1 = vector.load %arg2[%c0_1, %c0_2] : memref<44x640xf32, #tpu.memory_space<vmem>>, vector<44x640xf32>
    %cst = arith.constant dense<0.000000e+00> : vector<8x640xf32>
    %2 = tpu.matmul %0, %1, %cst {dimension_numbers = #tpu.dot_dimension_numbers<[1], [0], [0], [1], [0, 0, 1, 1], [], []>} : vector<8x44xf32>, vector<44x640xf32>, vector<8x640xf32> -> vector<8x640xf32>
    %c0_3 = arith.constant 0 : index
    %c0_4 = arith.constant 0 : index
    %3 = vector.load %arg3[%c0_3, %c0_4] : memref<1x640xf32, #tpu.memory_space<vmem>>, vector<1x640xf32>
    %4 = vector.broadcast %3 : vector<1x640xf32> to vector<8x640xf32>
    %5 = arith.addf %2, %4 : vector<8x640xf32>
    %cst_5 = arith.constant 0.000000e+00 : f32
    %6 = vector.broadcast %cst_5 : f32 to vector<8x640xf32>
    %7 = arith.cmpf ogt, %5, %6 : vector<8x640xf32>
    %cst_6 = arith.constant 0.00999999977 : f32
    %8 = vector.broadcast %cst_6 : f32 to vector<8x640xf32>
    %9 = arith.mulf %8, %5 : vector<8x640xf32>
    %10 = arith.select %7, %5, %9 : vector<8x640xi1>, vector<8x640xf32>
    %c0_7 = arith.constant 0 : index
    %c0_8 = arith.constant 0 : index
    %11 = vector.load %arg4[%c0_7, %c0_8] : memref<640x288xf32, #tpu.memory_space<vmem>>, vector<640x288xf32>
    %cst_9 = arith.constant dense<0.000000e+00> : vector<8x288xf32>
    %12 = tpu.matmul %10, %11, %cst_9 {dimension_numbers = #tpu.dot_dimension_numbers<[1], [0], [0], [1], [0, 0, 1, 1], [], []>} : vector<8x640xf32>, vector<640x288xf32>, vector<8x288xf32> -> vector<8x288xf32>
    %c0_10 = arith.constant 0 : index
    %c0_11 = arith.constant 0 : index
    %13 = vector.load %arg5[%c0_10, %c0_11] : memref<1x288xf32, #tpu.memory_space<vmem>>, vector<1x288xf32>
    %14 = vector.broadcast %13 : vector<1x288xf32> to vector<8x288xf32>
    %15 = arith.addf %12, %14 : vector<8x288xf32>
    %cst_12 = arith.constant 0.000000e+00 : f32
    %16 = vector.broadcast %cst_12 : f32 to vector<8x288xf32>
    %17 = arith.cmpf ogt, %15, %16 : vector<8x288xf32>
    %cst_13 = arith.constant 0.00999999977 : f32
    %18 = vector.broadcast %cst_13 : f32 to vector<8x288xf32>
    %19 = arith.mulf %18, %15 : vector<8x288xf32>
    %20 = arith.select %17, %15, %19 : vector<8x288xi1>, vector<8x288xf32>
    %c0_14 = arith.constant 0 : index
    %c0_15 = arith.constant 0 : index
    %21 = vector.load %arg6[%c0_14, %c0_15] : memref<288x128xf32, #tpu.memory_space<vmem>>, vector<288x128xf32>
    %cst_16 = arith.constant dense<0.000000e+00> : vector<8x128xf32>
    %22 = tpu.matmul %20, %21, %cst_16 {dimension_numbers = #tpu.dot_dimension_numbers<[1], [0], [0], [1], [0, 0, 1, 1], [], []>} : vector<8x288xf32>, vector<288x128xf32>, vector<8x128xf32> -> vector<8x128xf32>
    %c0_17 = arith.constant 0 : index
    %c0_18 = arith.constant 0 : index
    %23 = vector.load %arg7[%c0_17, %c0_18] : memref<1x128xf32, #tpu.memory_space<vmem>>, vector<1x128xf32>
    %24 = vector.broadcast %23 : vector<1x128xf32> to vector<8x128xf32>
    %25 = arith.addf %22, %24 : vector<8x128xf32>
    %cst_19 = arith.constant 0.000000e+00 : f32
    %26 = vector.broadcast %cst_19 : f32 to vector<8x128xf32>
    %27 = arith.cmpf ogt, %25, %26 : vector<8x128xf32>
    %cst_20 = arith.constant 0.00999999977 : f32
    %28 = vector.broadcast %cst_20 : f32 to vector<8x128xf32>
    %29 = arith.mulf %28, %25 : vector<8x128xf32>
    %30 = arith.select %27, %25, %29 : vector<8x128xi1>, vector<8x128xf32>
    %c0_21 = arith.constant 0 : index
    %c0_22 = arith.constant 0 : index
    %31 = vector.load %arg8[%c0_21, %c0_22] : memref<128x128xf32, #tpu.memory_space<vmem>>, vector<128x128xf32>
    %cst_23 = arith.constant dense<0.000000e+00> : vector<8x128xf32>
    %32 = tpu.matmul %30, %31, %cst_23 {dimension_numbers = #tpu.dot_dimension_numbers<[1], [0], [0], [1], [0, 0, 1, 1], [], []>} : vector<8x128xf32>, vector<128x128xf32>, vector<8x128xf32> -> vector<8x128xf32>
    %c0_24 = arith.constant 0 : index
    %c0_25 = arith.constant 0 : index
    %33 = vector.load %arg9[%c0_24, %c0_25] : memref<1x128xf32, #tpu.memory_space<vmem>>, vector<1x128xf32>
    %34 = vector.broadcast %33 : vector<1x128xf32> to vector<8x128xf32>
    %35 = arith.addf %32, %34 : vector<8x128xf32>
    %c0_26 = arith.constant 0 : index
    %c0_27 = arith.constant 0 : index
    %36 = vector.load %arg10[%c0_26, %c0_27] : memref<128x128xf32, #tpu.memory_space<vmem>>, vector<128x128xf32>
    %cst_28 = arith.constant dense<0.000000e+00> : vector<8x128xf32>
    %37 = tpu.matmul %35, %36, %cst_28 {dimension_numbers = #tpu.dot_dimension_numbers<[1], [0], [0], [1], [0, 0, 1, 1], [], []>} : vector<8x128xf32>, vector<128x128xf32>, vector<8x128xf32> -> vector<8x128xf32>
    %c0_29 = arith.constant 0 : index
    %c0_30 = arith.constant 0 : index
    %38 = vector.load %arg11[%c0_29, %c0_30] : memref<1x128xf32, #tpu.memory_space<vmem>>, vector<1x128xf32>
    %39 = vector.broadcast %38 : vector<1x128xf32> to vector<8x128xf32>
    %40 = arith.addf %37, %39 : vector<8x128xf32>
    %c0_31 = arith.constant 0 : index
    %c0_32 = arith.constant 0 : index
    %41 = vector.load %arg12[%c0_31, %c0_32] : memref<8x128xf32, #tpu.memory_space<vmem>>, vector<8x128xf32>
    tpu.vector_store %arg12[%c0_31, %c0_32], %40 {strides = array<i32>} : memref<8x128xf32, #tpu.memory_space<vmem>>, vector<8x128xf32>,
    return
  }
  func.func @transform_0(%arg0: i32) -> (i32, i32) {
    %c0_i32 = arith.constant 0 : i32
    %c0_i32_0 = arith.constant 0 : i32
    return %arg0, %c0_i32 : i32, i32
  }
  func.func @transform_1(%arg0: i32) -> (i32, i32) {
    %c0_i32 = arith.constant 0 : i32
    %c0_i32_0 = arith.constant 0 : i32
    %c0_i32_1 = arith.constant 0 : i32
    return %c0_i32, %c0_i32_0 : i32, i32
  }
  func.func @transform_2(%arg0: i32) -> (i32, i32) {
    %c0_i32 = arith.constant 0 : i32
    %c0_i32_0 = arith.constant 0 : i32
    %c0_i32_1 = arith.constant 0 : i32
    return %c0_i32, %c0_i32_0 : i32, i32
  }
  func.func @transform_3(%arg0: i32) -> (i32, i32) {
    %c0_i32 = arith.constant 0 : i32
    %c0_i32_0 = arith.constant 0 : i32
    %c0_i32_1 = arith.constant 0 : i32
    return %c0_i32, %c0_i32_0 : i32, i32
  }
  func.func @transform_4(%arg0: i32) -> (i32, i32) {
    %c0_i32 = arith.constant 0 : i32
    %c0_i32_0 = arith.constant 0 : i32
    %c0_i32_1 = arith.constant 0 : i32
    return %c0_i32, %c0_i32_0 : i32, i32
  }
  func.func @transform_5(%arg0: i32) -> (i32, i32) {
    %c0_i32 = arith.constant 0 : i32
    %c0_i32_0 = arith.constant 0 : i32
    %c0_i32_1 = arith.constant 0 : i32
    return %c0_i32, %c0_i32_0 : i32, i32
  }
  func.func @transform_6(%arg0: i32) -> (i32, i32) {
    %c0_i32 = arith.constant 0 : i32
    %c0_i32_0 = arith.constant 0 : i32
    %c0_i32_1 = arith.constant 0 : i32
    return %c0_i32, %c0_i32_0 : i32, i32
  }
  func.func @transform_7(%arg0: i32) -> (i32, i32) {
    %c0_i32 = arith.constant 0 : i32
    %c0_i32_0 = arith.constant 0 : i32
    %c0_i32_1 = arith.constant 0 : i32
    return %c0_i32, %c0_i32_0 : i32, i32
  }
  func.func @transform_8(%arg0: i32) -> (i32, i32) {
    %c0_i32 = arith.constant 0 : i32
    %c0_i32_0 = arith.constant 0 : i32
    %c0_i32_1 = arith.constant 0 : i32
    return %c0_i32, %c0_i32_0 : i32, i32
  }
  func.func @transform_9(%arg0: i32) -> (i32, i32) {
    %c0_i32 = arith.constant 0 : i32
    %c0_i32_0 = arith.constant 0 : i32
    %c0_i32_1 = arith.constant 0 : i32
    return %c0_i32, %c0_i32_0 : i32, i32
  }
  func.func @transform_10(%arg0: i32) -> (i32, i32) {
    %c0_i32 = arith.constant 0 : i32
    %c0_i32_0 = arith.constant 0 : i32
    %c0_i32_1 = arith.constant 0 : i32
    return %c0_i32, %c0_i32_0 : i32, i32
  }
  func.func @transform_11(%arg0: i32) -> (i32, i32) {
    %c0_i32 = arith.constant 0 : i32
    %c0_i32_0 = arith.constant 0 : i32
    return %arg0, %c0_i32 : i32, i32
  }
}

</mosaic_0001>

<llo_original>
// kernel: cnn_forward.1
$region0: #{cnn_forward.1}
  #allocation0 [shape = 'u32[]', space=smem, size = 0x4, offset = 0x4, fixed_abs, tag = 'smem constant byte address 0x4 - core index']
  #allocation1 [shape = 'u32[72,128]{1,0:T(1,128)}', space=vmem, size = 0x9000, scoped, tag = 'internal scratch']
  %s0 = inlined_call_operand.vmem [shape: f32[8,44], index: 0, kind: input, shape index: {}]
  %s1 = inlined_call_operand.vmem [shape: f32[44,640], index: 1, kind: input, shape index: {}]
  %s2 = inlined_call_operand.vmem [shape: f32[1,640], index: 2, kind: input, shape index: {}]
  %s3 = inlined_call_operand.vmem [shape: f32[640,288], index: 3, kind: input, shape index: {}]
  %s4 = inlined_call_operand.vmem [shape: f32[1,288], index: 4, kind: input, shape index: {}]
  %s5 = inlined_call_operand.vmem [shape: f32[288,128], index: 5, kind: input, shape index: {}]
  %s6 = inlined_call_operand.vmem [shape: f32[1,128], index: 6, kind: input, shape index: {}]
  %s7 = inlined_call_operand.vmem [shape: f32[128,128], index: 7, kind: input, shape index: {}]
  %s8 = inlined_call_operand.vmem [shape: f32[1,128], index: 8, kind: input, shape index: {}]
  %s9 = inlined_call_operand.vmem [shape: f32[128,128], index: 9, kind: input, shape index: {}]
  %s10 = inlined_call_operand.vmem [shape: f32[1,128], index: 10, kind: input, shape index: {}]
  %s11 = inlined_call_operand.vmem [shape: f32[8,128], index: 11, kind: output, shape index: {}]
  %s12 = sld [smem:[#allocation0]]
  $region54: #{cnn_forward.1} parent=0
    _
  %s14 = ssub.s32 1, %s12
  %s15 = scalar_select 0, %s14, %s12
  // Predicated region
  $region2: #{cnn_forward.1} parent=0 // pred_check
    _
  $region3: #{cnn_forward.1} parent=0 // pred_check_branch
    %17 = sbr.rel (0) target = $region5
  $region4: #{cnn_forward.1} parent=0 // pred_region
    _
  $region5: #{cnn_forward.1} parent=0 // pred_fallthru
    _
  // Predicated region
  $region6: #{cnn_forward.1} parent=0 // pred_check
    _
  $region7: #{cnn_forward.1} parent=0 // pred_check_branch
    %19 = sbr.rel (0) target = $region9
  $region8: #{cnn_forward.1} parent=0 // pred_region
    _
  $region9: #{cnn_forward.1} parent=0 // pred_fallthru
    _
  // Predicated region
  $region10: #{cnn_forward.1} parent=0 // pred_check
    _
  $region11: #{cnn_forward.1} parent=0 // pred_check_branch
    %21 = sbr.rel (0) target = $region13
  $region12: #{cnn_forward.1} parent=0 // pred_region
    _
  $region13: #{cnn_forward.1} parent=0 // pred_fallthru
    _
  // Predicated region
  $region14: #{cnn_forward.1} parent=0 // pred_check
    _
  $region15: #{cnn_forward.1} parent=0 // pred_check_branch
    %23 = sbr.rel (0) target = $region17
  $region16: #{cnn_forward.1} parent=0 // pred_region
    _
  $region17: #{cnn_forward.1} parent=0 // pred_fallthru
    _
  // Predicated region
  $region18: #{cnn_forward.1} parent=0 // pred_check
    _
  $region19: #{cnn_forward.1} parent=0 // pred_check_branch
    %25 = sbr.rel (0) target = $region21
  $region20: #{cnn_forward.1} parent=0 // pred_region
    _
  $region21: #{cnn_forward.1} parent=0 // pred_fallthru
    _
  // Predicated region
  $region22: #{cnn_forward.1} parent=0 // pred_check
    _
  $region23: #{cnn_forward.1} parent=0 // pred_check_branch
    %27 = sbr.rel (0) target = $region25
  $region24: #{cnn_forward.1} parent=0 // pred_region
    _
  $region25: #{cnn_forward.1} parent=0 // pred_fallthru
    _
  // Predicated region
  $region26: #{cnn_forward.1} parent=0 // pred_check
    _
  $region27: #{cnn_forward.1} parent=0 // pred_check_branch
    %29 = sbr.rel (0) target = $region29
  $region28: #{cnn_forward.1} parent=0 // pred_region
    _
  $region29: #{cnn_forward.1} parent=0 // pred_fallthru
    _
  // Predicated region
  $region30: #{cnn_forward.1} parent=0 // pred_check
    _
  $region31: #{cnn_forward.1} parent=0 // pred_check_branch
    %31 = sbr.rel (0) target = $region33
  $region32: #{cnn_forward.1} parent=0 // pred_region
    _
  $region33: #{cnn_forward.1} parent=0 // pred_fallthru
    _
  // Predicated region
  $region34: #{cnn_forward.1} parent=0 // pred_check
    _
  $region35: #{cnn_forward.1} parent=0 // pred_check_branch
    %33 = sbr.rel (0) target = $region37
  $region36: #{cnn_forward.1} parent=0 // pred_region
    _
  $region37: #{cnn_forward.1} parent=0 // pred_fallthru
    _
  // Predicated region
  $region38: #{cnn_forward.1} parent=0 // pred_check
    _
  $region39: #{cnn_forward.1} parent=0 // pred_check_branch
    %35 = sbr.rel (0) target = $region41
  $region40: #{cnn_forward.1} parent=0 // pred_region
    _
  $region41: #{cnn_forward.1} parent=0 // pred_fallthru
    _
  // Predicated region
  $region42: #{cnn_forward.1} parent=0 // pred_check
    _
  $region43: #{cnn_forward.1} parent=0 // pred_check_branch
    %37 = sbr.rel (0) target = $region45
  $region44: #{cnn_forward.1} parent=0 // pred_region
    _
  $region45: #{cnn_forward.1} parent=0 // pred_fallthru
    _
  %v38 = vld [vmem:[%s0] sm:$0xff]
  %v39 = vld [vmem:[%s1] sm:$0xff]
  %v40 = vld [vmem:[%s1 + $0x8] sm:$0xff]
  %v41 = vld [vmem:[%s1 + $0x10] sm:$0xff]
  %v42 = vld [vmem:[%s1 + $0x18] sm:$0xff]
  %v43 = vld [vmem:[%s1 + $0x20] sm:$0xff]
  %v44 = vld [vmem:[%s1 + $0x28] sm:$0xff]
  %v45 = vld [vmem:[%s1 + $0x30] sm:$0xff]
  %v46 = vld [vmem:[%s1 + $0x38] sm:$0xff]
  %v47 = vld [vmem:[%s1 + $0x40] sm:$0xff]
  %v48 = vld [vmem:[%s1 + $0x48] sm:$0xff]
  %v49 = vld [vmem:[%s1 + $0x50] sm:$0xff]
  %v50 = vld [vmem:[%s1 + $0x58] sm:$0xff]
  %v51 = vld [vmem:[%s1 + $0x60] sm:$0xff]
  %v52 = vld [vmem:[%s1 + $0x68] sm:$0xff]
  %v53 = vld [vmem:[%s1 + $0x70] sm:$0xff]
  %v54 = vld [vmem:[%s1 + $0x78] sm:$0xff]
  %v55 = vld [vmem:[%s1 + $0x80] sm:$0xff]
  %v56 = vld [vmem:[%s1 + $0x88] sm:$0xff]
  %v57 = vld [vmem:[%s1 + $0x90] sm:$0xff]
  %v58 = vld [vmem:[%s1 + $0x98] sm:$0xff]
  %v59 = vld [vmem:[%s1 + $0xa0] sm:$0xff]
  %v60 = vld [vmem:[%s1 + $0xa8] sm:$0xff]
  %v61 = vld [vmem:[%s1 + $0xb0] sm:$0xff]
  %v62 = vld [vmem:[%s1 + $0xb8] sm:$0xff]
  %v63 = vld [vmem:[%s1 + $0xc0] sm:$0xff]
  %v64 = vld [vmem:[%s1 + $0xc8] sm:$0xf]
  %v65 = vld [vmem:[%s1 + $0xd0] sm:$0xf]
  %v66 = vld [vmem:[%s1 + $0xd8] sm:$0xf]
  %v67 = vld [vmem:[%s1 + $0xe0] sm:$0xf]
  %v68 = vld [vmem:[%s1 + $0xe8] sm:$0xf]
  %v69 = vld [vmem:[%s2] sm:$0x1f]
  %v71 = vperm.slane %v69, 0
  %v72 = vperm.slane %v69, 1
  %v73 = vperm.slane %v69, 2
  %v74 = vperm.slane %v69, 3
  %v75 = vperm.slane %v69, 4
  %vm81 = vcmask 359424
  %v83 = vsel %vm81, %v38, 0
  %vm85 = vcmask 1043456
  %v87 = vsel %vm85, %v64, 0
  %v90 = vsel %vm85, %v65, 0
  %v93 = vsel %vm85, %v66, 0
  %v96 = vsel %vm85, %v67, 0
  %v99 = vsel %vm85, %v68, 0
  %101 = vmatpush.msra.mxu0 0.0
  %102 = vmatpush.msra.mxu0 0.0
  %103 = vmatpush.msra.mxu0 0.0
  %104 = vmatpush.msra.mxu0 0.0
  %105 = vmatpush.msra.mxu0 0.0
  %106 = vmatpush.msra.mxu0 0.0
  %107 = vmatpush.msra.mxu0 0.0
  %108 = vmatpush.msra.mxu0 0.0
  %109 = vmatpush.msra.mxu0 0.0
  %110 = vmatpush.msra.mxu0 0.0
  %111 = vmatpush.msra.mxu0 %v87
  %112 = vmatpush.msra.mxu0 %v59
  %113 = vmatpush.msra.mxu0 %v54
  %114 = vmatpush.msra.mxu0 %v49
  %115 = vmatpush.msra.mxu0 %v44
  %116 = vmatpush.msra.mxu0 %v39
  %117 = vmatmul.f32.gmra.mxu0 %v83
  %v118 = vpop.f32.mrf.mxu0
  %v119 = vadd.f32 %v71, %v118
  %120 = vdwg.mxu0
  %121 = vmatpush.msra.mxu0 0.0
  %122 = vmatpush.msra.mxu0 0.0
  %123 = vmatpush.msra.mxu0 0.0
  %124 = vmatpush.msra.mxu0 0.0
  %125 = vmatpush.msra.mxu0 0.0
  %126 = vmatpush.msra.mxu0 0.0
  %127 = vmatpush.msra.mxu0 0.0
  %128 = vmatpush.msra.mxu0 0.0
  %129 = vmatpush.msra.mxu0 0.0
  %130 = vmatpush.msra.mxu0 0.0
  %131 = vmatpush.msra.mxu0 %v90
  %132 = vmatpush.msra.mxu0 %v60
  %133 = vmatpush.msra.mxu0 %v55
  %134 = vmatpush.msra.mxu0 %v50
  %135 = vmatpush.msra.mxu0 %v45
  %136 = vmatpush.msra.mxu0 %v40
  %137 = vmatmul.f32.gmra.mxu0 %v83
  %v138 = vpop.f32.mrf.mxu0
  %v139 = vadd.f32 %v72, %v138
  %140 = vdwg.mxu0
  %141 = vmatpush.msra.mxu0 0.0
  %142 = vmatpush.msra.mxu0 0.0
  %143 = vmatpush.msra.mxu0 0.0
  %144 = vmatpush.msra.mxu0 0.0
  %145 = vmatpush.msra.mxu0 0.0
  %146 = vmatpush.msra.mxu0 0.0
  %147 = vmatpush.msra.mxu0 0.0
  %148 = vmatpush.msra.mxu0 0.0
  %149 = vmatpush.msra.mxu0 0.0
  %150 = vmatpush.msra.mxu0 0.0
  %151 = vmatpush.msra.mxu0 %v93
  %152 = vmatpush.msra.mxu0 %v61
  %153 = vmatpush.msra.mxu0 %v56
  %154 = vmatpush.msra.mxu0 %v51
  %155 = vmatpush.msra.mxu0 %v46
  %156 = vmatpush.msra.mxu0 %v41
  %157 = vmatmul.f32.gmra.mxu0 %v83
  %v158 = vpop.f32.mrf.mxu0
  %v159 = vadd.f32 %v73, %v158
  %160 = vdwg.mxu0
  %161 = vmatpush.msra.mxu0 0.0
  %162 = vmatpush.msra.mxu0 0.0
  %163 = vmatpush.msra.mxu0 0.0
  %164 = vmatpush.msra.mxu0 0.0
  %165 = vmatpush.msra.mxu0 0.0
  %166 = vmatpush.msra.mxu0 0.0
  %167 = vmatpush.msra.mxu0 0.0
  %168 = vmatpush.msra.mxu0 0.0
  %169 = vmatpush.msra.mxu0 0.0
  %170 = vmatpush.msra.mxu0 0.0
  %171 = vmatpush.msra.mxu0 %v96
  %172 = vmatpush.msra.mxu0 %v62
  %173 = vmatpush.msra.mxu0 %v57
  %174 = vmatpush.msra.mxu0 %v52
  %175 = vmatpush.msra.mxu0 %v47
  %176 = vmatpush.msra.mxu0 %v42
  %177 = vmatmul.f32.gmra.mxu0 %v83
  %v178 = vpop.f32.mrf.mxu0
  %v179 = vadd.f32 %v74, %v178
  %180 = vdwg.mxu0
  %181 = vmatpush.msra.mxu0 0.0
  %182 = vmatpush.msra.mxu0 0.0
  %183 = vmatpush.msra.mxu0 0.0
  %184 = vmatpush.msra.mxu0 0.0
  %185 = vmatpush.msra.mxu0 0.0
  %186 = vmatpush.msra.mxu0 0.0
  %187 = vmatpush.msra.mxu0 0.0
  %188 = vmatpush.msra.mxu0 0.0
  %189 = vmatpush.msra.mxu0 0.0
  %190 = vmatpush.msra.mxu0 0.0
  %191 = vmatpush.msra.mxu0 %v99
  %192 = vmatpush.msra.mxu0 %v63
  %193 = vmatpush.msra.mxu0 %v58
  %194 = vmatpush.msra.mxu0 %v53
  %195 = vmatpush.msra.mxu0 %v48
  %196 = vmatpush.msra.mxu0 %v43
  %197 = vmatmul.f32.gmra.mxu0 %v83
  %v198 = vpop.f32.mrf.mxu0
  %v199 = vadd.f32 %v75, %v198
  %200 = vdwg.mxu0
  %vm201 = vcmp.gt.f32.partialorder %v119, 0.0
  %vm202 = vcmp.gt.f32.partialorder %v139, 0.0
  %vm203 = vcmp.gt.f32.partialorder %v159, 0.0
  %vm204 = vcmp.gt.f32.partialorder %v179, 0.0
  %vm205 = vcmp.gt.f32.partialorder %v199, 0.0
  %v206 = vmul.f32 %v119, 0.01
  %v207 = vmul.f32 %v139, 0.01
  %v208 = vmul.f32 %v159, 0.01
  %v209 = vmul.f32 %v179, 0.01
  %v210 = vmul.f32 %v199, 0.01
  %v211 = vsel %vm201, %v119, %v206
  %v212 = vsel %vm202, %v139, %v207
  %v213 = vsel %vm203, %v159, %v208
  %v214 = vsel %vm204, %v179, %v209
  %v215 = vsel %vm205, %v199, %v210
  %v216 = vld [vmem:[%s3] sm:$0xff]
  %v217 = vld [vmem:[%s3 + $0x8] sm:$0xff]
  %v218 = vld [vmem:[%s3 + $0x10] sm:$0xff]
  %v219 = vld [vmem:[%s3 + $0x18] sm:$0xff]
  %v220 = vld [vmem:[%s3 + $0x20] sm:$0xff]
  %v221 = vld [vmem:[%s3 + $0x28] sm:$0xff]
  %v222 = vld [vmem:[%s3 + $0x30] sm:$0xff]
  %v223 = vld [vmem:[%s3 + $0x38] sm:$0xff]
  %v224 = vld [vmem:[%s3 + $0x40] sm:$0xff]
  %v225 = vld [vmem:[%s3 + $0x48] sm:$0xff]
  %v226 = vld [vmem:[%s3 + $0x50] sm:$0xff]
  %v227 = vld [vmem:[%s3 + $0x58] sm:$0xff]
  %v228 = vld [vmem:[%s3 + $0x60] sm:$0xff]
  %v229 = vld [vmem:[%s3 + $0x68] sm:$0xff]
  %v230 = vld [vmem:[%s3 + $0x70] sm:$0xff]
  %v231 = vld [vmem:[%s3 + $0x78] sm:$0xff]
  %v232 = vld [vmem:[%s3 + $0x80] sm:$0xff]
  %v233 = vld [vmem:[%s3 + $0x88] sm:$0xff]
  %v234 = vld [vmem:[%s3 + $0x90] sm:$0xff]
  %v235 = vld [vmem:[%s3 + $0x98] sm:$0xff]
  %v236 = vld [vmem:[%s3 + $0xa0] sm:$0xff]
  %v237 = vld [vmem:[%s3 + $0xa8] sm:$0xff]
  %v238 = vld [vmem:[%s3 + $0xb0] sm:$0xff]
  %v239 = vld [vmem:[%s3 + $0xb8] sm:$0xff]
  %v240 = vld [vmem:[%s3 + $0xc0] sm:$0xff]
  %v241 = vld [vmem:[%s3 + $0xc8] sm:$0xff]
  %v242 = vld [vmem:[%s3 + $0xd0] sm:$0xff]
  %v243 = vld [vmem:[%s3 + $0xd8] sm:$0xff]
  %v244 = vld [vmem:[%s3 + $0xe0] sm:$0xff]
  %v245 = vld [vmem:[%s3 + $0xe8] sm:$0xff]
  %v246 = vld [vmem:[%s3 + $0xf0] sm:$0xff]
  %v247 = vld [vmem:[%s3 + $0xf8] sm:$0xff]
  %v248 = vld [vmem:[%s3 + $0x100] sm:$0xff]
  %v249 = vld [vmem:[%s3 + $0x108] sm:$0xff]
  %v250 = vld [vmem:[%s3 + $0x110] sm:$0xff]
  %v251 = vld [vmem:[%s3 + $0x118] sm:$0xff]
  %v252 = vld [vmem:[%s3 + $0x120] sm:$0xff]
  %v253 = vld [vmem:[%s3 + $0x128] sm:$0xff]
  %v254 = vld [vmem:[%s3 + $0x130] sm:$0xff]
  %v255 = vld [vmem:[%s3 + $0x138] sm:$0xff]
  %v256 = vld [vmem:[%s3 + $0x140] sm:$0xff]
  %v257 = vld [vmem:[%s3 + $0x148] sm:$0xff]
  %v258 = vld [vmem:[%s3 + $0x150] sm:$0xff]
  %v259 = vld [vmem:[%s3 + $0x158] sm:$0xff]
  %v260 = vld [vmem:[%s3 + $0x160] sm:$0xff]
  %v261 = vld [vmem:[%s3 + $0x168] sm:$0xff]
  %v262 = vld [vmem:[%s3 + $0x170] sm:$0xff]
  %v263 = vld [vmem:[%s3 + $0x178] sm:$0xff]
  %v264 = vld [vmem:[%s3 + $0x180] sm:$0xff]
  %v265 = vld [vmem:[%s3 + $0x188] sm:$0xff]
  %v266 = vld [vmem:[%s3 + $0x190] sm:$0xff]
  %v267 = vld [vmem:[%s3 + $0x198] sm:$0xff]
  %v268 = vld [vmem:[%s3 + $0x1a0] sm:$0xff]
  %v269 = vld [vmem:[%s3 + $0x1a8] sm:$0xff]
  %v270 = vld [vmem:[%s3 + $0x1b0] sm:$0xff]
  %v271 = vld [vmem:[%s3 + $0x1b8] sm:$0xff]
  %v272 = vld [vmem:[%s3 + $0x1c0] sm:$0xff]
  %v273 = vld [vmem:[%s3 + $0x1c8] sm:$0xff]
  %v274 = vld [vmem:[%s3 + $0x1d0] sm:$0xff]
  %v275 = vld [vmem:[%s3 + $0x1d8] sm:$0xff]
  %v276 = vld [vmem:[%s3 + $0x1e0] sm:$0xff]
  %v277 = vld [vmem:[%s3 + $0x1e8] sm:$0xff]
  %v278 = vld [vmem:[%s3 + $0x1f0] sm:$0xff]
  %v279 = vld [vmem:[%s3 + $0x1f8] sm:$0xff]
  %v280 = vld [vmem:[%s3 + $0x200] sm:$0xff]
  %v281 = vld [vmem:[%s3 + $0x208] sm:$0xff]
  %v282 = vld [vmem:[%s3 + $0x210] sm:$0xff]
  %v283 = vld [vmem:[%s3 + $0x218] sm:$0xff]
  %v284 = vld [vmem:[%s3 + $0x220] sm:$0xff]
  %v285 = vld [vmem:[%s3 + $0x228] sm:$0xff]
  %v286 = vld [vmem:[%s3 + $0x230] sm:$0xff]
  %v287 = vld [vmem:[%s3 + $0x238] sm:$0xff]
  %v288 = vld [vmem:[%s3 + $0x240] sm:$0xff]
  %v289 = vld [vmem:[%s3 + $0x248] sm:$0xff]
  %v290 = vld [vmem:[%s3 + $0x250] sm:$0xff]
  %v291 = vld [vmem:[%s3 + $0x258] sm:$0xff]
  %v292 = vld [vmem:[%s3 + $0x260] sm:$0xff]
  %v293 = vld [vmem:[%s3 + $0x268] sm:$0xff]
  %v294 = vld [vmem:[%s3 + $0x270] sm:$0xff]
  %v295 = vld [vmem:[%s3 + $0x278] sm:$0xff]
  %v296 = vld [vmem:[%s3 + $0x280] sm:$0xff]
  %v297 = vld [vmem:[%s3 + $0x288] sm:$0xff]
  %v298 = vld [vmem:[%s3 + $0x290] sm:$0xff]
  %v299 = vld [vmem:[%s3 + $0x298] sm:$0xff]
  %v300 = vld [vmem:[%s3 + $0x2a0] sm:$0xff]
  %v301 = vld [vmem:[%s3 + $0x2a8] sm:$0xff]
  %v302 = vld [vmem:[%s3 + $0x2b0] sm:$0xff]
  %v303 = vld [vmem:[%s3 + $0x2b8] sm:$0xff]
  %v304 = vld [vmem:[%s3 + $0x2c0] sm:$0xff]
  %v305 = vld [vmem:[%s3 + $0x2c8] sm:$0xff]
  %v306 = vld [vmem:[%s3 + $0x2d0] sm:$0xff]
  %v307 = vld [vmem:[%s3 + $0x2d8] sm:$0xff]
  %v308 = vld [vmem:[%s3 + $0x2e0] sm:$0xff]
  %v309 = vld [vmem:[%s3 + $0x2e8] sm:$0xff]
  %v310 = vld [vmem:[%s3 + $0x2f0] sm:$0xff]
  %v311 = vld [vmem:[%s3 + $0x2f8] sm:$0xff]
  %v312 = vld [vmem:[%s3 + $0x300] sm:$0xff]
  %v313 = vld [vmem:[%s3 + $0x308] sm:$0xff]
  %v314 = vld [vmem:[%s3 + $0x310] sm:$0xff]
  %v315 = vld [vmem:[%s3 + $0x318] sm:$0xff]
  %v316 = vld [vmem:[%s3 + $0x320] sm:$0xff]
  %v317 = vld [vmem:[%s3 + $0x328] sm:$0xff]
  %v318 = vld [vmem:[%s3 + $0x330] sm:$0xff]
  %v319 = vld [vmem:[%s3 + $0x338] sm:$0xff]
  %v320 = vld [vmem:[%s3 + $0x340] sm:$0xff]
  %v321 = vld [vmem:[%s3 + $0x348] sm:$0xff]
  %v322 = vld [vmem:[%s3 + $0x350] sm:$0xff]
  %v323 = vld [vmem:[%s3 + $0x358] sm:$0xff]
  %v324 = vld [vmem:[%s3 + $0x360] sm:$0xff]
  %v325 = vld [vmem:[%s3 + $0x368] sm:$0xff]
  %v326 = vld [vmem:[%s3 + $0x370] sm:$0xff]
  %v327 = vld [vmem:[%s3 + $0x378] sm:$0xff]
  %v328 = vld [vmem:[%s3 + $0x380] sm:$0xff]
  %v329 = vld [vmem:[%s3 + $0x388] sm:$0xff]
  %v330 = vld [vmem:[%s3 + $0x390] sm:$0xff]
  %v331 = vld [vmem:[%s3 + $0x398] sm:$0xff]
  %v332 = vld [vmem:[%s3 + $0x3a0] sm:$0xff]
  %v333 = vld [vmem:[%s3 + $0x3a8] sm:$0xff]
  %v334 = vld [vmem:[%s3 + $0x3b0] sm:$0xff]
  %v335 = vld [vmem:[%s3 + $0x3b8] sm:$0xff]
  %v336 = vld [vmem:[%s3 + $0x3c0] sm:$0xff]
  %v337 = vld [vmem:[%s3 + $0x3c8] sm:$0xff]
  %v338 = vld [vmem:[%s3 + $0x3d0] sm:$0xff]
  %v339 = vld [vmem:[%s3 + $0x3d8] sm:$0xff]
  %v340 = vld [vmem:[%s3 + $0x3e0] sm:$0xff]
  %v341 = vld [vmem:[%s3 + $0x3e8] sm:$0xff]
  %v342 = vld [vmem:[%s3 + $0x3f0] sm:$0xff]
  %v343 = vld [vmem:[%s3 + $0x3f8] sm:$0xff]
  %v344 = vld [vmem:[%s3 + $0x400] sm:$0xff]
  %v345 = vld [vmem:[%s3 + $0x408] sm:$0xff]
  %v346 = vld [vmem:[%s3 + $0x410] sm:$0xff]
  %v347 = vld [vmem:[%s3 + $0x418] sm:$0xff]
  %v348 = vld [vmem:[%s3 + $0x420] sm:$0xff]
  %v349 = vld [vmem:[%s3 + $0x428] sm:$0xff]
  %v350 = vld [vmem:[%s3 + $0x430] sm:$0xff]
  %v351 = vld [vmem:[%s3 + $0x438] sm:$0xff]
  %v352 = vld [vmem:[%s3 + $0x440] sm:$0xff]
  %v353 = vld [vmem:[%s3 + $0x448] sm:$0xff]
  %v354 = vld [vmem:[%s3 + $0x450] sm:$0xff]
  %v355 = vld [vmem:[%s3 + $0x458] sm:$0xff]
  %v356 = vld [vmem:[%s3 + $0x460] sm:$0xff]
  %v357 = vld [vmem:[%s3 + $0x468] sm:$0xff]
  %v358 = vld [vmem:[%s3 + $0x470] sm:$0xff]
  %v359 = vld [vmem:[%s3 + $0x478] sm:$0xff]
  %v360 = vld [vmem:[%s3 + $0x480] sm:$0xff]
  %v361 = vld [vmem:[%s3 + $0x488] sm:$0xff]
  %v362 = vld [vmem:[%s3 + $0x490] sm:$0xff]
  %v363 = vld [vmem:[%s3 + $0x498] sm:$0xff]
  %v364 = vld [vmem:[%s3 + $0x4a0] sm:$0xff]
  %v365 = vld [vmem:[%s3 + $0x4a8] sm:$0xff]
  %v366 = vld [vmem:[%s3 + $0x4b0] sm:$0xff]
  %v367 = vld [vmem:[%s3 + $0x4b8] sm:$0xff]
  %v368 = vld [vmem:[%s3 + $0x4c0] sm:$0xff]
  %v369 = vld [vmem:[%s3 + $0x4c8] sm:$0xff]
  %v370 = vld [vmem:[%s3 + $0x4d0] sm:$0xff]
  %v371 = vld [vmem:[%s3 + $0x4d8] sm:$0xff]
  %v372 = vld [vmem:[%s3 + $0x4e0] sm:$0xff]
  %v373 = vld [vmem:[%s3 + $0x4e8] sm:$0xff]
  %v374 = vld [vmem:[%s3 + $0x4f0] sm:$0xff]
  %v375 = vld [vmem:[%s3 + $0x4f8] sm:$0xff]
  %v376 = vld [vmem:[%s3 + $0x500] sm:$0xff]
  %v377 = vld [vmem:[%s3 + $0x508] sm:$0xff]
  %v378 = vld [vmem:[%s3 + $0x510] sm:$0xff]
  %v379 = vld [vmem:[%s3 + $0x518] sm:$0xff]
  %v380 = vld [vmem:[%s3 + $0x520] sm:$0xff]
  %v381 = vld [vmem:[%s3 + $0x528] sm:$0xff]
  %v382 = vld [vmem:[%s3 + $0x530] sm:$0xff]
  %v383 = vld [vmem:[%s3 + $0x538] sm:$0xff]
  %v384 = vld [vmem:[%s3 + $0x540] sm:$0xff]
  %v385 = vld [vmem:[%s3 + $0x548] sm:$0xff]
  %v386 = vld [vmem:[%s3 + $0x550] sm:$0xff]
  %v387 = vld [vmem:[%s3 + $0x558] sm:$0xff]
  %v388 = vld [vmem:[%s3 + $0x560] sm:$0xff]
  %v389 = vld [vmem:[%s3 + $0x568] sm:$0xff]
  %v390 = vld [vmem:[%s3 + $0x570] sm:$0xff]
  %v391 = vld [vmem:[%s3 + $0x578] sm:$0xff]
  %v392 = vld [vmem:[%s3 + $0x580] sm:$0xff]
  %v393 = vld [vmem:[%s3 + $0x588] sm:$0xff]
  %v394 = vld [vmem:[%s3 + $0x590] sm:$0xff]
  %v395 = vld [vmem:[%s3 + $0x598] sm:$0xff]
  %v396 = vld [vmem:[%s3 + $0x5a0] sm:$0xff]
  %v397 = vld [vmem:[%s3 + $0x5a8] sm:$0xff]
  %v398 = vld [vmem:[%s3 + $0x5b0] sm:$0xff]
  %v399 = vld [vmem:[%s3 + $0x5b8] sm:$0xff]
  %v400 = vld [vmem:[%s3 + $0x5c0] sm:$0xff]
  %v401 = vld [vmem:[%s3 + $0x5c8] sm:$0xff]
  %v402 = vld [vmem:[%s3 + $0x5d0] sm:$0xff]
  %v403 = vld [vmem:[%s3 + $0x5d8] sm:$0xff]
  %v404 = vld [vmem:[%s3 + $0x5e0] sm:$0xff]
  %v405 = vld [vmem:[%s3 + $0x5e8] sm:$0xff]
  %v406 = vld [vmem:[%s3 + $0x5f0] sm:$0xff]
  %v407 = vld [vmem:[%s3 + $0x5f8] sm:$0xff]
  %v408 = vld [vmem:[%s3 + $0x600] sm:$0xff]
  %v409 = vld [vmem:[%s3 + $0x608] sm:$0xff]
  %v410 = vld [vmem:[%s3 + $0x610] sm:$0xff]
  %v411 = vld [vmem:[%s3 + $0x618] sm:$0xff]
  %v412 = vld [vmem:[%s3 + $0x620] sm:$0xff]
  %v413 = vld [vmem:[%s3 + $0x628] sm:$0xff]
  %v414 = vld [vmem:[%s3 + $0x630] sm:$0xff]
  %v415 = vld [vmem:[%s3 + $0x638] sm:$0xff]
  %v416 = vld [vmem:[%s3 + $0x640] sm:$0xff]
  %v417 = vld [vmem:[%s3 + $0x648] sm:$0xff]
  %v418 = vld [vmem:[%s3 + $0x650] sm:$0xff]
  %v419 = vld [vmem:[%s3 + $0x658] sm:$0xff]
  %v420 = vld [vmem:[%s3 + $0x660] sm:$0xff]
  %v421 = vld [vmem:[%s3 + $0x668] sm:$0xff]
  %v422 = vld [vmem:[%s3 + $0x670] sm:$0xff]
  %v423 = vld [vmem:[%s3 + $0x678] sm:$0xff]
  %v424 = vld [vmem:[%s3 + $0x680] sm:$0xff]
  %v425 = vld [vmem:[%s3 + $0x688] sm:$0xff]
  %v426 = vld [vmem:[%s3 + $0x690] sm:$0xff]
  %v427 = vld [vmem:[%s3 + $0x698] sm:$0xff]
  %v428 = vld [vmem:[%s3 + $0x6a0] sm:$0xff]
  %v429 = vld [vmem:[%s3 + $0x6a8] sm:$0xff]
  %v430 = vld [vmem:[%s3 + $0x6b0] sm:$0xff]
  %v431 = vld [vmem:[%s3 + $0x6b8] sm:$0xff]
  %v432 = vld [vmem:[%s3 + $0x6c0] sm:$0xff]
  %v433 = vld [vmem:[%s3 + $0x6c8] sm:$0xff]
  %v434 = vld [vmem:[%s3 + $0x6d0] sm:$0xff]
  %v435 = vld [vmem:[%s3 + $0x6d8] sm:$0xff]
  %v436 = vld [vmem:[%s3 + $0x6e0] sm:$0xff]
  %v437 = vld [vmem:[%s3 + $0x6e8] sm:$0xff]
  %v438 = vld [vmem:[%s3 + $0x6f0] sm:$0xff]
  %v439 = vld [vmem:[%s3 + $0x6f8] sm:$0xff]
  %v440 = vld [vmem:[%s3 + $0x700] sm:$0xff]
  %v441 = vld [vmem:[%s3 + $0x708] sm:$0xff]
  %v442 = vld [vmem:[%s3 + $0x710] sm:$0xff]
  %v443 = vld [vmem:[%s3 + $0x718] sm:$0xff]
  %v444 = vld [vmem:[%s3 + $0x720] sm:$0xff]
  %v445 = vld [vmem:[%s3 + $0x728] sm:$0xff]
  %v446 = vld [vmem:[%s3 + $0x730] sm:$0xff]
  %v447 = vld [vmem:[%s3 + $0x738] sm:$0xff]
  %v448 = vld [vmem:[%s3 + $0x740] sm:$0xff]
  %v449 = vld [vmem:[%s3 + $0x748] sm:$0xff]
  %v450 = vld [vmem:[%s3 + $0x750] sm:$0xff]
  %v451 = vld [vmem:[%s3 + $0x758] sm:$0xff]
  %v452 = vld [vmem:[%s3 + $0x760] sm:$0xff]
  %v453 = vld [vmem:[%s3 + $0x768] sm:$0xff]
  %v454 = vld [vmem:[%s3 + $0x770] sm:$0xff]
  %v455 = vld [vmem:[%s3 + $0x778] sm:$0xff]
  %v456 = vld [vmem:[%s4] sm:$0x7]
  %v458 = vperm.slane %v456, 0
  %v459 = vperm.slane %v456, 1
  %v460 = vperm.slane %v456, 2
  %464 = vmatpush.msra.mxu0 %v261
  %465 = vmatpush.msra.mxu0 %v258
  %466 = vmatpush.msra.mxu0 %v255
  %467 = vmatpush.msra.mxu0 %v252
  %468 = vmatpush.msra.mxu0 %v249
  %469 = vmatpush.msra.mxu0 %v246
  %470 = vmatpush.msra.mxu0 %v243
  %471 = vmatpush.msra.mxu0 %v240
  %472 = vmatpush.msra.mxu0 %v237
  %473 = vmatpush.msra.mxu0 %v234
  %474 = vmatpush.msra.mxu0 %v231
  %475 = vmatpush.msra.mxu0 %v228
  %476 = vmatpush.msra.mxu0 %v225
  %477 = vmatpush.msra.mxu0 %v222
  %478 = vmatpush.msra.mxu0 %v219
  %479 = vmatpush.msra.mxu0 %v216
  %480 = vmatmul.f32.gmra.mxu0 %v211
  %v481 = vpop.f32.mrf.mxu0
  %v482 = vadd.f32 %v458, %v481
  %483 = vdwg.mxu0
  %484 = vmatpush.msra.mxu0 %v309
  %485 = vmatpush.msra.mxu0 %v306
  %486 = vmatpush.msra.mxu0 %v303
  %487 = vmatpush.msra.mxu0 %v300
  %488 = vmatpush.msra.mxu0 %v297
  %489 = vmatpush.msra.mxu0 %v294
  %490 = vmatpush.msra.mxu0 %v291
  %491 = vmatpush.msra.mxu0 %v288
  %492 = vmatpush.msra.mxu0 %v285
  %493 = vmatpush.msra.mxu0 %v282
  %494 = vmatpush.msra.mxu0 %v279
  %495 = vmatpush.msra.mxu0 %v276
  %496 = vmatpush.msra.mxu0 %v273
  %497 = vmatpush.msra.mxu0 %v270
  %498 = vmatpush.msra.mxu0 %v267
  %499 = vmatpush.msra.mxu0 %v264
  %500 = vmatmul.f32.gmra.mxu0 %v212
  %v501 = vpop.f32.mrf.mxu0
  %v502 = vadd.f32 %v482, %v501
  %503 = vdwg.mxu0
  %504 = vmatpush.msra.mxu0 %v357
  %505 = vmatpush.msra.mxu0 %v354
  %506 = vmatpush.msra.mxu0 %v351
  %507 = vmatpush.msra.mxu0 %v348
  %508 = vmatpush.msra.mxu0 %v345
  %509 = vmatpush.msra.mxu0 %v342
  %510 = vmatpush.msra.mxu0 %v339
  %511 = vmatpush.msra.mxu0 %v336
  %512 = vmatpush.msra.mxu0 %v333
  %513 = vmatpush.msra.mxu0 %v330
  %514 = vmatpush.msra.mxu0 %v327
  %515 = vmatpush.msra.mxu0 %v324
  %516 = vmatpush.msra.mxu0 %v321
  %517 = vmatpush.msra.mxu0 %v318
  %518 = vmatpush.msra.mxu0 %v315
  %519 = vmatpush.msra.mxu0 %v312
  %520 = vmatmul.f32.gmra.mxu0 %v213
  %v521 = vpop.f32.mrf.mxu0
  %v522 = vadd.f32 %v502, %v521
  %523 = vdwg.mxu0
  %524 = vmatpush.msra.mxu0 %v405
  %525 = vmatpush.msra.mxu0 %v402
  %526 = vmatpush.msra.mxu0 %v399
  %527 = vmatpush.msra.mxu0 %v396
  %528 = vmatpush.msra.mxu0 %v393
  %529 = vmatpush.msra.mxu0 %v390
  %530 = vmatpush.msra.mxu0 %v387
  %531 = vmatpush.msra.mxu0 %v384
  %532 = vmatpush.msra.mxu0 %v381
  %533 = vmatpush.msra.mxu0 %v378
  %534 = vmatpush.msra.mxu0 %v375
  %535 = vmatpush.msra.mxu0 %v372
  %536 = vmatpush.msra.mxu0 %v369
  %537 = vmatpush.msra.mxu0 %v366
  %538 = vmatpush.msra.mxu0 %v363
  %539 = vmatpush.msra.mxu0 %v360
  %540 = vmatmul.f32.gmra.mxu0 %v214
  %v541 = vpop.f32.mrf.mxu0
  %v542 = vadd.f32 %v522, %v541
  %543 = vdwg.mxu0
  %544 = vmatpush.msra.mxu0 %v453
  %545 = vmatpush.msra.mxu0 %v450
  %546 = vmatpush.msra.mxu0 %v447
  %547 = vmatpush.msra.mxu0 %v444
  %548 = vmatpush.msra.mxu0 %v441
  %549 = vmatpush.msra.mxu0 %v438
  %550 = vmatpush.msra.mxu0 %v435
  %551 = vmatpush.msra.mxu0 %v432
  %552 = vmatpush.msra.mxu0 %v429
  %553 = vmatpush.msra.mxu0 %v426
  %554 = vmatpush.msra.mxu0 %v423
  %555 = vmatpush.msra.mxu0 %v420
  %556 = vmatpush.msra.mxu0 %v417
  %557 = vmatpush.msra.mxu0 %v414
  %558 = vmatpush.msra.mxu0 %v411
  %559 = vmatpush.msra.mxu0 %v408
  %560 = vmatmul.f32.gmra.mxu0 %v215
  %v561 = vpop.f32.mrf.mxu0
  %v562 = vadd.f32 %v542, %v561
  %563 = vdwg.mxu0
  %564 = vmatpush.msra.mxu0 %v262
  %565 = vmatpush.msra.mxu0 %v259
  %566 = vmatpush.msra.mxu0 %v256
  %567 = vmatpush.msra.mxu0 %v253
  %568 = vmatpush.msra.mxu0 %v250
  %569 = vmatpush.msra.mxu0 %v247
  %570 = vmatpush.msra.mxu0 %v244
  %571 = vmatpush.msra.mxu0 %v241
  %572 = vmatpush.msra.mxu0 %v238
  %573 = vmatpush.msra.mxu0 %v235
  %574 = vmatpush.msra.mxu0 %v232
  %575 = vmatpush.msra.mxu0 %v229
  %576 = vmatpush.msra.mxu0 %v226
  %577 = vmatpush.msra.mxu0 %v223
  %578 = vmatpush.msra.mxu0 %v220
  %579 = vmatpush.msra.mxu0 %v217
  %580 = vmatmul.f32.gmra.mxu0 %v211
  %v581 = vpop.f32.mrf.mxu0
  %v582 = vadd.f32 %v459, %v581
  %583 = vdwg.mxu0
  %584 = vmatpush.msra.mxu0 %v310
  %585 = vmatpush.msra.mxu0 %v307
  %586 = vmatpush.msra.mxu0 %v304
  %587 = vmatpush.msra.mxu0 %v301
  %588 = vmatpush.msra.mxu0 %v298
  %589 = vmatpush.msra.mxu0 %v295
  %590 = vmatpush.msra.mxu0 %v292
  %591 = vmatpush.msra.mxu0 %v289
  %592 = vmatpush.msra.mxu0 %v286
  %593 = vmatpush.msra.mxu0 %v283
  %594 = vmatpush.msra.mxu0 %v280
  %595 = vmatpush.msra.mxu0 %v277
  %596 = vmatpush.msra.mxu0 %v274
  %597 = vmatpush.msra.mxu0 %v271
  %598 = vmatpush.msra.mxu0 %v268
  %599 = vmatpush.msra.mxu0 %v265
  %600 = vmatmul.f32.gmra.mxu0 %v212
  %v601 = vpop.f32.mrf.mxu0
  %v602 = vadd.f32 %v582, %v601
  %603 = vdwg.mxu0
  %604 = vmatpush.msra.mxu0 %v358
  %605 = vmatpush.msra.mxu0 %v355
  %606 = vmatpush.msra.mxu0 %v352
  %607 = vmatpush.msra.mxu0 %v349
  %608 = vmatpush.msra.mxu0 %v346
  %609 = vmatpush.msra.mxu0 %v343
  %610 = vmatpush.msra.mxu0 %v340
  %611 = vmatpush.msra.mxu0 %v337
  %612 = vmatpush.msra.mxu0 %v334
  %613 = vmatpush.msra.mxu0 %v331
  %614 = vmatpush.msra.mxu0 %v328
  %615 = vmatpush.msra.mxu0 %v325
  %616 = vmatpush.msra.mxu0 %v322
  %617 = vmatpush.msra.mxu0 %v319
  %618 = vmatpush.msra.mxu0 %v316
  %619 = vmatpush.msra.mxu0 %v313
  %620 = vmatmul.f32.gmra.mxu0 %v213
  %v621 = vpop.f32.mrf.mxu0
  %v622 = vadd.f32 %v602, %v621
  %623 = vdwg.mxu0
  %624 = vmatpush.msra.mxu0 %v406
  %625 = vmatpush.msra.mxu0 %v403
  %626 = vmatpush.msra.mxu0 %v400
  %627 = vmatpush.msra.mxu0 %v397
  %628 = vmatpush.msra.mxu0 %v394
  %629 = vmatpush.msra.mxu0 %v391
  %630 = vmatpush.msra.mxu0 %v388
  %631 = vmatpush.msra.mxu0 %v385
  %632 = vmatpush.msra.mxu0 %v382
  %633 = vmatpush.msra.mxu0 %v379
  %634 = vmatpush.msra.mxu0 %v376
  %635 = vmatpush.msra.mxu0 %v373
  %636 = vmatpush.msra.mxu0 %v370
  %637 = vmatpush.msra.mxu0 %v367
  %638 = vmatpush.msra.mxu0 %v364
  %639 = vmatpush.msra.mxu0 %v361
  %640 = vmatmul.f32.gmra.mxu0 %v214
  %v641 = vpop.f32.mrf.mxu0
  %v642 = vadd.f32 %v622, %v641
  %643 = vdwg.mxu0
  %644 = vmatpush.msra.mxu0 %v454
  %645 = vmatpush.msra.mxu0 %v451
  %646 = vmatpush.msra.mxu0 %v448
  %647 = vmatpush.msra.mxu0 %v445
  %648 = vmatpush.msra.mxu0 %v442
  %649 = vmatpush.msra.mxu0 %v439
  %650 = vmatpush.msra.mxu0 %v436
  %651 = vmatpush.msra.mxu0 %v433
  %652 = vmatpush.msra.mxu0 %v430
  %653 = vmatpush.msra.mxu0 %v427
  %654 = vmatpush.msra.mxu0 %v424
  %655 = vmatpush.msra.mxu0 %v421
  %656 = vmatpush.msra.mxu0 %v418
  %657 = vmatpush.msra.mxu0 %v415
  %658 = vmatpush.msra.mxu0 %v412
  %659 = vmatpush.msra.mxu0 %v409
  %660 = vmatmul.f32.gmra.mxu0 %v215
  %v661 = vpop.f32.mrf.mxu0
  %v662 = vadd.f32 %v642, %v661
  %663 = vdwg.mxu0
  %664 = vmatpush.msra.mxu0 %v263
  %665 = vmatpush.msra.mxu0 %v260
  %666 = vmatpush.msra.mxu0 %v257
  %667 = vmatpush.msra.mxu0 %v254
  %668 = vmatpush.msra.mxu0 %v251
  %669 = vmatpush.msra.mxu0 %v248
  %670 = vmatpush.msra.mxu0 %v245
  %671 = vmatpush.msra.mxu0 %v242
  %672 = vmatpush.msra.mxu0 %v239
  %673 = vmatpush.msra.mxu0 %v236
  %674 = vmatpush.msra.mxu0 %v233
  %675 = vmatpush.msra.mxu0 %v230
  %676 = vmatpush.msra.mxu0 %v227
  %677 = vmatpush.msra.mxu0 %v224
  %678 = vmatpush.msra.mxu0 %v221
  %679 = vmatpush.msra.mxu0 %v218
  %680 = vmatmul.f32.gmra.mxu0 %v211
  %v681 = vpop.f32.mrf.mxu0
  %v682 = vadd.f32 %v460, %v681
  %683 = vdwg.mxu0
  %684 = vmatpush.msra.mxu0 %v311
  %685 = vmatpush.msra.mxu0 %v308
  %686 = vmatpush.msra.mxu0 %v305
  %687 = vmatpush.msra.mxu0 %v302
  %688 = vmatpush.msra.mxu0 %v299
  %689 = vmatpush.msra.mxu0 %v296
  %690 = vmatpush.msra.mxu0 %v293
  %691 = vmatpush.msra.mxu0 %v290
  %692 = vmatpush.msra.mxu0 %v287
  %693 = vmatpush.msra.mxu0 %v284
  %694 = vmatpush.msra.mxu0 %v281
  %695 = vmatpush.msra.mxu0 %v278
  %696 = vmatpush.msra.mxu0 %v275
  %697 = vmatpush.msra.mxu0 %v272
  %698 = vmatpush.msra.mxu0 %v269
  %699 = vmatpush.msra.mxu0 %v266
  %700 = vmatmul.f32.gmra.mxu0 %v212
  %v701 = vpop.f32.mrf.mxu0
  %v702 = vadd.f32 %v682, %v701
  %703 = vdwg.mxu0
  %704 = vmatpush.msra.mxu0 %v359
  %705 = vmatpush.msra.mxu0 %v356
  %706 = vmatpush.msra.mxu0 %v353
  %707 = vmatpush.msra.mxu0 %v350
  %708 = vmatpush.msra.mxu0 %v347
  %709 = vmatpush.msra.mxu0 %v344
  %710 = vmatpush.msra.mxu0 %v341
  %711 = vmatpush.msra.mxu0 %v338
  %712 = vmatpush.msra.mxu0 %v335
  %713 = vmatpush.msra.mxu0 %v332
  %714 = vmatpush.msra.mxu0 %v329
  %715 = vmatpush.msra.mxu0 %v326
  %716 = vmatpush.msra.mxu0 %v323
  %717 = vmatpush.msra.mxu0 %v320
  %718 = vmatpush.msra.mxu0 %v317
  %719 = vmatpush.msra.mxu0 %v314
  %720 = vmatmul.f32.gmra.mxu0 %v213
  %v721 = vpop.f32.mrf.mxu0
  %v722 = vadd.f32 %v702, %v721
  %723 = vdwg.mxu0
  %724 = vmatpush.msra.mxu0 %v407
  %725 = vmatpush.msra.mxu0 %v404
  %726 = vmatpush.msra.mxu0 %v401
  %727 = vmatpush.msra.mxu0 %v398
  %728 = vmatpush.msra.mxu0 %v395
  %729 = vmatpush.msra.mxu0 %v392
  %730 = vmatpush.msra.mxu0 %v389
  %731 = vmatpush.msra.mxu0 %v386
  %732 = vmatpush.msra.mxu0 %v383
  %733 = vmatpush.msra.mxu0 %v380
  %734 = vmatpush.msra.mxu0 %v377
  %735 = vmatpush.msra.mxu0 %v374
  %736 = vmatpush.msra.mxu0 %v371
  %737 = vmatpush.msra.mxu0 %v368
  %738 = vmatpush.msra.mxu0 %v365
  %739 = vmatpush.msra.mxu0 %v362
  %740 = vmatmul.f32.gmra.mxu0 %v214
  %v741 = vpop.f32.mrf.mxu0
  %v742 = vadd.f32 %v722, %v741
  %743 = vdwg.mxu0
  %744 = vmatpush.msra.mxu0 %v455
  %745 = vmatpush.msra.mxu0 %v452
  %746 = vmatpush.msra.mxu0 %v449
  %747 = vmatpush.msra.mxu0 %v446
  %748 = vmatpush.msra.mxu0 %v443
  %749 = vmatpush.msra.mxu0 %v440
  %750 = vmatpush.msra.mxu0 %v437
  %751 = vmatpush.msra.mxu0 %v434
  %752 = vmatpush.msra.mxu0 %v431
  %753 = vmatpush.msra.mxu0 %v428
  %754 = vmatpush.msra.mxu0 %v425
  %755 = vmatpush.msra.mxu0 %v422
  %756 = vmatpush.msra.mxu0 %v419
  %757 = vmatpush.msra.mxu0 %v416
  %758 = vmatpush.msra.mxu0 %v413
  %759 = vmatpush.msra.mxu0 %v410
  %760 = vmatmul.f32.gmra.mxu0 %v215
  %v761 = vpop.f32.mrf.mxu0
  %v762 = vadd.f32 %v742, %v761
  %763 = vdwg.mxu0
  %vm764 = vcmp.gt.f32.partialorder %v562, 0.0
  %vm765 = vcmp.gt.f32.partialorder %v662, 0.0
  %vm766 = vcmp.gt.f32.partialorder %v762, 0.0
  %v767 = vmul.f32 %v562, 0.01
  %v768 = vmul.f32 %v662, 0.01
  %v769 = vmul.f32 %v762, 0.01
  %v770 = vsel %vm764, %v562, %v767
  %v771 = vsel %vm765, %v662, %v768
  %v772 = vsel %vm766, %v762, %v769
  %v773 = vld [vmem:[%s5] sm:$0xff]
  %v774 = vld [vmem:[%s5 + $0x8] sm:$0xff]
  %v775 = vld [vmem:[%s5 + $0x10] sm:$0xff]
  %v776 = vld [vmem:[%s5 + $0x18] sm:$0xff]
  %v777 = vld [vmem:[%s5 + $0x20] sm:$0xff]
  %v778 = vld [vmem:[%s5 + $0x28] sm:$0xff]
  %v779 = vld [vmem:[%s5 + $0x30] sm:$0xff]
  %v780 = vld [vmem:[%s5 + $0x38] sm:$0xff]
  %v781 = vld [vmem:[%s5 + $0x40] sm:$0xff]
  %v782 = vld [vmem:[%s5 + $0x48] sm:$0xff]
  %v783 = vld [vmem:[%s5 + $0x50] sm:$0xff]
  %v784 = vld [vmem:[%s5 + $0x58] sm:$0xff]
  %v785 = vld [vmem:[%s5 + $0x60] sm:$0xff]
  %v786 = vld [vmem:[%s5 + $0x68] sm:$0xff]
  %v787 = vld [vmem:[%s5 + $0x70] sm:$0xff]
  %v788 = vld [vmem:[%s5 + $0x78] sm:$0xff]
  %v789 = vld [vmem:[%s5 + $0x80] sm:$0xff]
  %v790 = vld [vmem:[%s5 + $0x88] sm:$0xff]
  %v791 = vld [vmem:[%s5 + $0x90] sm:$0xff]
  %v792 = vld [vmem:[%s5 + $0x98] sm:$0xff]
  %v793 = vld [vmem:[%s5 + $0xa0] sm:$0xff]
  %v794 = vld [vmem:[%s5 + $0xa8] sm:$0xff]
  %v795 = vld [vmem:[%s5 + $0xb0] sm:$0xff]
  %v796 = vld [vmem:[%s5 + $0xb8] sm:$0xff]
  %v797 = vld [vmem:[%s5 + $0xc0] sm:$0xff]
  %v798 = vld [vmem:[%s5 + $0xc8] sm:$0xff]
  %v799 = vld [vmem:[%s5 + $0xd0] sm:$0xff]
  %v800 = vld [vmem:[%s5 + $0xd8] sm:$0xff]
  %v801 = vld [vmem:[%s5 + $0xe0] sm:$0xff]
  %v802 = vld [vmem:[%s5 + $0xe8] sm:$0xff]
  %v803 = vld [vmem:[%s5 + $0xf0] sm:$0xff]
  %v804 = vld [vmem:[%s5 + $0xf8] sm:$0xff]
  %v805 = vld [vmem:[%s5 + $0x100] sm:$0xff]
  %v806 = vld [vmem:[%s5 + $0x108] sm:$0xff]
  %v807 = vld [vmem:[%s5 + $0x110] sm:$0xff]
  %v808 = vld [vmem:[%s5 + $0x118] sm:$0xff]
  %v809 = vld [vmem:[%s6] sm:$0x1]
  %v811 = vperm.slane %v809, 0
  %vm813 = vcmask 261120
  %v815 = vsel %vm813, %v772, 0
  %817 = vmatpush.msra.mxu0 %v788
  %818 = vmatpush.msra.mxu0 %v787
  %819 = vmatpush.msra.mxu0 %v786
  %820 = vmatpush.msra.mxu0 %v785
  %821 = vmatpush.msra.mxu0 %v784
  %822 = vmatpush.msra.mxu0 %v783
  %823 = vmatpush.msra.mxu0 %v782
  %824 = vmatpush.msra.mxu0 %v781
  %825 = vmatpush.msra.mxu0 %v780
  %826 = vmatpush.msra.mxu0 %v779
  %827 = vmatpush.msra.mxu0 %v778
  %828 = vmatpush.msra.mxu0 %v777
  %829 = vmatpush.msra.mxu0 %v776
  %830 = vmatpush.msra.mxu0 %v775
  %831 = vmatpush.msra.mxu0 %v774
  %832 = vmatpush.msra.mxu0 %v773
  %833 = vmatmul.f32.gmra.mxu0 %v770
  %v834 = vpop.f32.mrf.mxu0
  %v835 = vadd.f32 %v811, %v834
  %836 = vdwg.mxu0
  %837 = vmatpush.msra.mxu0 %v804
  %838 = vmatpush.msra.mxu0 %v803
  %839 = vmatpush.msra.mxu0 %v802
  %840 = vmatpush.msra.mxu0 %v801
  %841 = vmatpush.msra.mxu0 %v800
  %842 = vmatpush.msra.mxu0 %v799
  %843 = vmatpush.msra.mxu0 %v798
  %844 = vmatpush.msra.mxu0 %v797
  %845 = vmatpush.msra.mxu0 %v796
  %846 = vmatpush.msra.mxu0 %v795
  %847 = vmatpush.msra.mxu0 %v794
  %848 = vmatpush.msra.mxu0 %v793
  %849 = vmatpush.msra.mxu0 %v792
  %850 = vmatpush.msra.mxu0 %v791
  %851 = vmatpush.msra.mxu0 %v790
  %852 = vmatpush.msra.mxu0 %v789
  %853 = vmatmul.f32.gmra.mxu0 %v771
  %v854 = vpop.f32.mrf.mxu0
  %v855 = vadd.f32 %v835, %v854
  %856 = vdwg.mxu0
  %857 = vmatpush.msra.mxu0 0.0
  %858 = vmatpush.msra.mxu0 0.0
  %859 = vmatpush.msra.mxu0 0.0
  %860 = vmatpush.msra.mxu0 0.0
  %861 = vmatpush.msra.mxu0 0.0
  %862 = vmatpush.msra.mxu0 0.0
  %863 = vmatpush.msra.mxu0 0.0
  %864 = vmatpush.msra.mxu0 0.0
  %865 = vmatpush.msra.mxu0 0.0
  %866 = vmatpush.msra.mxu0 0.0
  %867 = vmatpush.msra.mxu0 0.0
  %868 = vmatpush.msra.mxu0 0.0
  %869 = vmatpush.msra.mxu0 %v808
  %870 = vmatpush.msra.mxu0 %v807
  %871 = vmatpush.msra.mxu0 %v806
  %872 = vmatpush.msra.mxu0 %v805
  %873 = vmatmul.f32.gmra.mxu0 %v815
  %v874 = vpop.f32.mrf.mxu0
  %v875 = vadd.f32 %v855, %v874
  %876 = vdwg.mxu0
  %vm877 = vcmp.gt.f32.partialorder %v875, 0.0
  %v878 = vmul.f32 %v875, 0.01
  %v879 = vsel %vm877, %v875, %v878
  %v880 = vld [vmem:[%s7] sm:$0xff]
  %v881 = vld [vmem:[%s7 + $0x8] sm:$0xff]
  %v882 = vld [vmem:[%s7 + $0x10] sm:$0xff]
  %v883 = vld [vmem:[%s7 + $0x18] sm:$0xff]
  %v884 = vld [vmem:[%s7 + $0x20] sm:$0xff]
  %v885 = vld [vmem:[%s7 + $0x28] sm:$0xff]
  %v886 = vld [vmem:[%s7 + $0x30] sm:$0xff]
  %v887 = vld [vmem:[%s7 + $0x38] sm:$0xff]
  %v888 = vld [vmem:[%s7 + $0x40] sm:$0xff]
  %v889 = vld [vmem:[%s7 + $0x48] sm:$0xff]
  %v890 = vld [vmem:[%s7 + $0x50] sm:$0xff]
  %v891 = vld [vmem:[%s7 + $0x58] sm:$0xff]
  %v892 = vld [vmem:[%s7 + $0x60] sm:$0xff]
  %v893 = vld [vmem:[%s7 + $0x68] sm:$0xff]
  %v894 = vld [vmem:[%s7 + $0x70] sm:$0xff]
  %v895 = vld [vmem:[%s7 + $0x78] sm:$0xff]
  %v896 = vld [vmem:[%s8] sm:$0x1]
  %v898 = vperm.slane %v896, 0
  %900 = vmatpush.msra.mxu0 %v895
  %901 = vmatpush.msra.mxu0 %v894
  %902 = vmatpush.msra.mxu0 %v893
  %903 = vmatpush.msra.mxu0 %v892
  %904 = vmatpush.msra.mxu0 %v891
  %905 = vmatpush.msra.mxu0 %v890
  %906 = vmatpush.msra.mxu0 %v889
  %907 = vmatpush.msra.mxu0 %v888
  %908 = vmatpush.msra.mxu0 %v887
  %909 = vmatpush.msra.mxu0 %v886
  %910 = vmatpush.msra.mxu0 %v885
  %911 = vmatpush.msra.mxu0 %v884
  %912 = vmatpush.msra.mxu0 %v883
  %913 = vmatpush.msra.mxu0 %v882
  %914 = vmatpush.msra.mxu0 %v881
  %915 = vmatpush.msra.mxu0 %v880
  %916 = vmatmul.f32.gmra.mxu0 %v879
  %v917 = vpop.f32.mrf.mxu0
  %v918 = vadd.f32 %v898, %v917
  %919 = vdwg.mxu0
  %v920 = vld [vmem:[%s9] sm:$0xff]
  %v921 = vld [vmem:[%s9 + $0x8] sm:$0xff]
  %v922 = vld [vmem:[%s9 + $0x10] sm:$0xff]
  %v923 = vld [vmem:[%s9 + $0x18] sm:$0xff]
  %v924 = vld [vmem:[%s9 + $0x20] sm:$0xff]
  %v925 = vld [vmem:[%s9 + $0x28] sm:$0xff]
  %v926 = vld [vmem:[%s9 + $0x30] sm:$0xff]
  %v927 = vld [vmem:[%s9 + $0x38] sm:$0xff]
  %v928 = vld [vmem:[%s9 + $0x40] sm:$0xff]
  %v929 = vld [vmem:[%s9 + $0x48] sm:$0xff]
  %v930 = vld [vmem:[%s9 + $0x50] sm:$0xff]
  %v931 = vld [vmem:[%s9 + $0x58] sm:$0xff]
  %v932 = vld [vmem:[%s9 + $0x60] sm:$0xff]
  %v933 = vld [vmem:[%s9 + $0x68] sm:$0xff]
  %v934 = vld [vmem:[%s9 + $0x70] sm:$0xff]
  %v935 = vld [vmem:[%s9 + $0x78] sm:$0xff]
  %v936 = vld [vmem:[%s10] sm:$0x1]
  %v938 = vperm.slane %v936, 0
  %940 = vmatpush.msra.mxu0 %v935
  %941 = vmatpush.msra.mxu0 %v934
  %942 = vmatpush.msra.mxu0 %v933
  %943 = vmatpush.msra.mxu0 %v932
  %944 = vmatpush.msra.mxu0 %v931
  %945 = vmatpush.msra.mxu0 %v930
  %946 = vmatpush.msra.mxu0 %v929
  %947 = vmatpush.msra.mxu0 %v928
  %948 = vmatpush.msra.mxu0 %v927
  %949 = vmatpush.msra.mxu0 %v926
  %950 = vmatpush.msra.mxu0 %v925
  %951 = vmatpush.msra.mxu0 %v924
  %952 = vmatpush.msra.mxu0 %v923
  %953 = vmatpush.msra.mxu0 %v922
  %954 = vmatpush.msra.mxu0 %v921
  %955 = vmatpush.msra.mxu0 %v920
  %956 = vmatmul.f32.gmra.mxu0 %v918
  %v957 = vpop.f32.mrf.mxu0
  %v958 = vadd.f32 %v938, %v957
  %959 = vdwg.mxu0
  %960 = vst [vmem:[%s11] sm:$0xff] %v958
  // Predicated region
  $region46: #{cnn_forward.1} parent=0 // pred_check
    _
  $region47: #{cnn_forward.1} parent=0 // pred_check_branch
    %962 = sbr.rel (0) target = $region49
  $region48: #{cnn_forward.1} parent=0 // pred_region
    _
  $region49: #{cnn_forward.1} parent=0 // pred_fallthru
    _
  // Predicated region
  $region50: #{cnn_forward.1} parent=0 // pred_check
    _
  $region51: #{cnn_forward.1} parent=0 // pred_check_branch
    %964 = sbr.rel (0) target = $region53
  $region52: #{cnn_forward.1} parent=0 // pred_region
    _
  $region53: #{cnn_forward.1} parent=0 // pred_fallthru
    _

</llo_original>
